<compile_context>
chip_gen: v7x
topology: tpu7x:2x2x1
jax: 0.10.0
libtpu: 0.0.40
codegen_flags: <defaults>
</compile_context>

<pallas_src>
import jax
import jax.numpy as jnp
from jax import lax
from jax.experimental import pallas as pl
from jax.experimental.pallas import tpu as pltpu

_LANE = 128
_SQRT_HALF = 0.7071067811865476  # sqrt(0.5): folds the -0.5 of exp(-0.5 r^2) into the scale


def _cdiv(a, b):
    return -(-a // b)


# ---------------------------------------------------------------------------
# chip-dependent budgets
# ---------------------------------------------------------------------------
def _vmem_capacity_bytes():
    try:
        info = pltpu.get_tpu_info()
    except Exception:
        return 64 * 1024 * 1024
    for attr in ("vmem_capacity_bytes", "vmem_bytes", "vmem_size_bytes"):
        v = getattr(info, attr, None)
        if v:
            return int(v)
    return 64 * 1024 * 1024


def _budget():
    """(per-block f32 output-tile cap, scoped vmem limit), keyed on the chip generation."""
    vmem = _vmem_capacity_bytes()
    if vmem >= 96 * 1024 * 1024:                    # v5e / v6e: 128 MiB physical VMEM
        return 4 * 1024 * 1024, 64 * 1024 * 1024
    return 2 * 1024 * 1024, 32 * 1024 * 1024        # v7x (64 MiB physical) / unknown


def _compiler_params(vmem_limit):
    return pltpu.CompilerParams(
        dimension_semantics=("parallel", "parallel"),
        vmem_limit_bytes=vmem_limit,
    )


def _cost(Bp, Tp, Tz, D, dtype):
    out_elems = Bp * Tp * Tz
    return pl.CostEstimate(
        flops=3 * D * out_elems,
        transcendentals=out_elems,
        bytes_accessed=out_elems * jnp.dtype(dtype).itemsize + 4 * Bp * D * (Tp + Tz + 1),
    )


# ---------------------------------------------------------------------------
# kernel bodies
# ---------------------------------------------------------------------------
def _se_body_fold(x_ref, z_ref, ils_ref, o_ref):
    """Pairs folded onto the lane (last) axis -- used when Tz < 128.

    x_ref:   (1, D, Tt, Bb)
    z_ref:   (1, D, Tz, Bb)
    ils_ref: (1, D, 1,  Bb)   sqrt(0.5) / lengthscale
    o_ref:   (1, Tt, Tz, Bb)
    """
    d_dims, tt = x_ref.shape[1], x_ref.shape[2]
    tz, bb = z_ref.shape[2], z_ref.shape[3]

    # hoisted once per block: scale rows and pre-scaled Z (O(D*(Tz+1)*Bb) elements)
    ls = [ils_ref[0, d].astype(jnp.float32) for d in range(d_dims)]           # (1, Bb)
    zs = [z_ref[0, d].astype(jnp.float32) * ls[d] for d in range(d_dims)]     # (Tz, Bb)

    tc = 16 if tt % 16 == 0 else (8 if tt % 8 == 0 else tt)
    nchunk = tt // tc

    def emit(t0):
        acc = jnp.zeros((tc, tz, bb), jnp.float32)
        for d in range(d_dims):  # static unroll over the (small) feature dim
            xs = x_ref[0, d, pl.ds(t0, tc), :].astype(jnp.float32) * ls[d]    # (tc, Bb)
            diff = xs[:, None, :] - zs[d][None, :, :]                         # (tc, Tz, Bb)
            acc = acc - diff * diff                                           # -0.5 folded in scale
        o_ref[0, pl.ds(t0, tc), :, :] = jnp.exp(acc).astype(o_ref.dtype)

    if nchunk == 1:
        emit(0)
    else:
        def body(c, carry):
            emit(pl.multiple_of(c * tc, tc))
            return carry
        lax.fori_loop(0, nchunk, body, 0, unroll=nchunk <= 4)


def _se_body_wide(x_ref, z_ref, ils_ref, o_ref):
    """Tz >= 128: per-pair layout, Tz already fills the lane axis.

    x_ref:   (1, D, Bb, Tt)
    z_ref:   (1, D, Bb, Tz)
    ils_ref: (1, D, Bb, 1)    sqrt(0.5) / lengthscale
    o_ref:   (1, Bb, Tt, Tz)
    """
    d_dims, bb, tt = x_ref.shape[1], x_ref.shape[2], x_ref.shape[3]
    tz = z_ref.shape[3]

    bc = 8 if bb % 8 == 0 else bb
    nchunk = bb // bc

    def emit(b0):
        acc = jnp.zeros((bc, tt, tz), jnp.float32)
        for d in range(d_dims):
            ld = ils_ref[0, d, pl.ds(b0, bc), :].astype(jnp.float32)          # (bc, 1)
            xs = x_ref[0, d, pl.ds(b0, bc), :].astype(jnp.float32) * ld       # (bc, Tt)
            zs = z_ref[0, d, pl.ds(b0, bc), :].astype(jnp.float32) * ld       # (bc, Tz)
            diff = xs[:, :, None] - zs[:, None, :]                            # (bc, Tt, Tz)
            acc = acc - diff * diff
        o_ref[0, pl.ds(b0, bc), :, :] = jnp.exp(acc).astype(o_ref.dtype)

    if nchunk == 1:
        emit(0)
    else:
        def body(c, carry):
            emit(pl.multiple_of(c * bc, bc))
            return carry
        lax.fori_loop(0, nchunk, body, 0, unroll=nchunk <= 4)


# ---------------------------------------------------------------------------
# block-size planning
# ---------------------------------------------------------------------------
def _fold_plan(B, T, Tz, tile_cap):
    # lane width (pairs per block): keep it a dense multiple of 128 whenever B allows;
    # pad B up rather than dropping below 128 (masked vst.msk stores are the big lever).
    if B >= _LANE:
        bb = _LANE
        while (bb * 2 <= B and bb * T * Tz * 4 < 256 * 1024
               and bb * 2 * T * Tz * 4 <= tile_cap):
            bb *= 2
    else:
        bb = B
    nblk = _cdiv(B, bb)

    # query-axis (sublane) tile; multiple of 16 so in-kernel sub-tiles stay aligned.
    # (fold path has Tz < 128, so bb*Tz*4 <= 64 KiB and max_tt is always >= 16.)
    max_tt = max(16, (tile_cap // (bb * Tz * 4) // 16) * 16)
    if T <= max_tt:
        Tt, nT = T, 1
    else:
        Tt, nT = max_tt, _cdiv(T, max_tt)

    # v7x megacore: ensure >= 2 parallel grid blocks when splittable without hurting lanes
    if nblk * nT == 1:
        if T >= 32:
            Tt = ((_cdiv(T, 2) + 15) // 16) * 16
            nT = _cdiv(T, Tt)
        elif B >= 2 * _LANE:
            bb = _cdiv(_cdiv(B, 2), _LANE) * _LANE
            nblk = _cdiv(B, bb)
    return bb, nblk, Tt, nT


def _wide_plan(B, T, Tz, tile_cap):
    # query-axis tile is the lane dim of X -> multiple of 128 when tiled; sized so an
    # 8-pair sub-tile's diff/square/exp chain stays ~0.5 MiB.
    tt_chain = max(1, (512 * 1024) // (8 * Tz * 4))
    tt_cap = max(1, tile_cap // (Tz * 4))
    tt = min(tt_chain, tt_cap, T)
    if tt >= T:
        Tt, nT = T, 1
    else:
        Tt = max(_LANE, (tt // _LANE) * _LANE)
        nT = _cdiv(T, Tt)

    cap = max(1, tile_cap // (Tt * Tz * 4))
    bb = min(B, cap)
    if bb > 8:
        bb = (bb // 8) * 8
    nblk = _cdiv(B, bb)

    # v7x megacore: ensure >= 2 parallel grid blocks when the pair axis can be split
    if nblk * nT == 1 and B >= 2:
        bb = _cdiv(B, 2)
        if bb > 8:
            bb = _cdiv(bb, 8) * 8
        nblk = _cdiv(B, bb)
    return bb, nblk, Tt, nT


# ---------------------------------------------------------------------------
# launchers
# ---------------------------------------------------------------------------
def _se_fold(Xf, Zf, inv_b, T, Tz, D, B, out_dtype, tile_cap, vmem_limit):
    bb, nblk, Tt, nT = _fold_plan(B, T, Tz, tile_cap)
    Bp, Tp = nblk * bb, nT * Tt
    padB = Bp - B

    def prep(a, L, Lp):  # (B, L, D) -> (nblk, D, Lp, bb)
        a = jnp.pad(a, ((0, padB), (0, Lp - L), (0, 0)))
        return a.reshape(nblk, bb, Lp, D).transpose(0, 3, 2, 1)

    xt = prep(Xf, T, Tp)                                             # (nblk, D, Tp, bb)
    zt = prep(Zf, Tz, Tz)                                            # (nblk, D, Tz, bb)
    lp = jnp.pad(inv_b, ((0, padB), (0, 0)), constant_values=1.0)
    ls = lp.reshape(nblk, bb, 1, D).transpose(0, 3, 2, 1)            # (nblk, D, 1, bb)

    outp = pl.pallas_call(
        _se_body_fold,
        out_shape=jax.ShapeDtypeStruct((nblk, Tp, Tz, bb), out_dtype),
        grid_spec=pltpu.PrefetchScalarGridSpec(
            num_scalar_prefetch=0,
            grid=(nblk, nT),
            in_specs=[
                pl.BlockSpec((1, D, Tt, bb), lambda i, t: (i, 0, t, 0)),
                pl.BlockSpec((1, D, Tz, bb), lambda i, t: (i, 0, 0, 0)),
                pl.BlockSpec((1, D, 1, bb), lambda i, t: (i, 0, 0, 0)),
            ],
            out_specs=pl.BlockSpec((1, Tt, Tz, bb), lambda i, t: (i, t, 0, 0)),
        ),
        compiler_params=_compiler_params(vmem_limit),
        cost_estimate=_cost(Bp, Tp, Tz, D, out_dtype),
    )(xt, zt, ls)

    # unfold: (nblk, Tp, Tz, bb) -> (B, T, Tz)   (layout plumbing outside the hot kernel)
    out = outp.transpose(0, 3, 1, 2).reshape(Bp, Tp, Tz)
    return out[:B, :T]


def _se_wide(Xf, Zf, inv_b, T, Tz, D, B, out_dtype, tile_cap, vmem_limit):
    bb, nblk, Tt, nT = _wide_plan(B, T, Tz, tile_cap)
    Bp, Tp = nblk * bb, nT * Tt
    padB = Bp - B

    def prep(a, L, Lp):  # (B, L, D) -> (nblk, D, bb, Lp)
        a = jnp.pad(a, ((0, padB), (0, Lp - L), (0, 0)))
        return a.reshape(nblk, bb, Lp, D).transpose(0, 3, 1, 2)

    xt = prep(Xf, T, Tp)                                             # (nblk, D, bb, Tp)
    zt = prep(Zf, Tz, Tz)                                            # (nblk, D, bb, Tz)
    lp = jnp.pad(inv_b, ((0, padB), (0, 0)), constant_values=1.0)
    ls = lp.reshape(nblk, bb, D).transpose(0, 2, 1)[..., None]       # (nblk, D, bb, 1)

    outp = pl.pallas_call(
        _se_body_wide,
        out_shape=jax.ShapeDtypeStruct((nblk, bb, Tp, Tz), out_dtype),
        grid_spec=pltpu.PrefetchScalarGridSpec(
            num_scalar_prefetch=0,
            grid=(nblk, nT),
            in_specs=[
                pl.BlockSpec((1, D, bb, Tt), lambda i, t: (i, 0, 0, t)),
                pl.BlockSpec((1, D, bb, Tz), lambda i, t: (i, 0, 0, 0)),
                pl.BlockSpec((1, D, bb, 1), lambda i, t: (i, 0, 0, 0)),
            ],
            out_specs=pl.BlockSpec((1, bb, Tt, Tz), lambda i, t: (i, 0, t, 0)),
        ),
        compiler_params=_compiler_params(vmem_limit),
        cost_estimate=_cost(Bp, Tp, Tz, D, out_dtype),
    )(xt, zt, ls)

    out = outp.reshape(Bp, Tp, Tz)                                   # free unfold
    return out[:B, :T]


# ---------------------------------------------------------------------------
# public wrapper: SquaredExponential.forward (euclid topology)
# ---------------------------------------------------------------------------
def squared_exponential(X, lengthscale, Z=None, diag=False, track_dims=None):
    """X, Z: (K, N, T, D); lengthscale: positive (N, D). Returns (K, N, T, Tz)."""
    if X.ndim != 4:
        raise ValueError("Input X must be of shape (K x N x T x D).")
    if track_dims is not None:
        X = X[..., track_dims]
        if Z is not None:
            Z = Z[..., track_dims]

    K, N, T, D = X.shape
    if diag:  # matches the PyTorch module: X.new_ones(K, N, T)
        return jnp.ones((K, N, T), X.dtype)

    if Z is None:
        Tz = T
    else:
        if Z.shape[-1] != D:
            raise ValueError("Inputs must have the same number of features.")
        Tz = Z.shape[2]

    B = K * N
    out_dtype = X.dtype
    tile_cap, vmem_limit = _budget()

    # parameter transform once in the wrapper; sqrt(0.5) folds the exp(-0.5*) factor
    inv_b = jnp.tile((_SQRT_HALF / lengthscale).astype(jnp.float32), (K, 1))  # (B, D)
    Xf = X.reshape(B, T, D)
    Zf = Xf if Z is None else Z.reshape(B, Tz, D)

    if Tz >= _LANE:
        out = _se_wide(Xf, Zf, inv_b, T, Tz, D, B, out_dtype, tile_cap, vmem_limit)
    else:
        out = _se_fold(Xf, Zf, inv_b, T, Tz, D, B, out_dtype, tile_cap, vmem_limit)
    return out.reshape(K, N, T, Tz)


# ---------------------------------------------------------------------------
# pure-JAX reference (mirrors the PyTorch _square_scaled_dist + exp path)
# ---------------------------------------------------------------------------
def _reference(X, lengthscale, Z=None):
    if Z is None:
        Z = X
    ls = lengthscale[None, :, None, :].astype(jnp.float32)
    sx = X.astype(jnp.float32) / ls
    sz = Z.astype(jnp.float32) / ls
    x2 = jnp.sum(sx * sx, -1, keepdims=True)
    z2 = jnp.sum(sz * sz, -1, keepdims=True)
    xz = jnp.einsum("knid,knjd->knij", sx, sz)
    r2 = jnp.clip(x2 - 2.0 * xz + jnp.swapaxes(z2, -1, -2), 0.0, None)
    return jnp.exp(-0.5 * r2)


if __name__ == "__main__":
    key = jax.random.PRNGKey(0)

    def make_lengthscale(k, N, D):
        # mimic __init__: ctor arg (dims, neurons) > 0; _lengthscale = log(arg).T; l = exp(.)
        raw = 0.5 + jax.random.uniform(k, (D, N), dtype=jnp.float32)
        return jnp.exp(jnp.log(raw).T)                               # (N, D) positive

    keys = jax.random.split(key, 10)

    # 1) tiny K(X, X): fold path, all 8 (k, n) pairs in one block
    K, N, T, D = 2, 4, 16, 3
    X = jax.random.normal(keys[0], (K, N, T, D), dtype=jnp.float32)
    ls = make_lengthscale(keys[1], N, D)
    out = jax.block_until_ready(squared_exponential(X, ls))
    assert out.shape == (K, N, T, T)
    assert jnp.allclose(out, _reference(X, ls), atol=1e-4, rtol=1e-4), "tiny K(X,X) mismatch"

    # 2) K(X, X) with 128 (k, n) pairs: lane-dense folded stores (128-wide lane axis)
    K2, N2, T2 = 4, 32, 16
    X2 = jax.random.normal(keys[2], (K2, N2, T2, D), dtype=jnp.float32)
    ls2 = make_lengthscale(keys[3], N2, D)
    out2 = jax.block_until_ready(squared_exponential(X2, ls2))
    assert out2.shape == (K2, N2, T2, T2)
    assert jnp.allclose(out2, _reference(X2, ls2), atol=1e-4, rtol=1e-4), "dense K(X,X) mismatch"

    # 3) cross covariance K(X, Z) with Tz = 128: wide (natural-layout) path
    K3, N3, T3, Tz3 = 1, 2, 8, 128
    X3 = jax.random.normal(keys[4], (K3, N3, T3, D), dtype=jnp.float32)
    Z3 = jax.random.normal(keys[5], (K3, N3, Tz3, D), dtype=jnp.float32)
    ls3 = make_lengthscale(keys[6], N3, D)
    out3 = jax.block_until_ready(squared_exponential(X3, ls3, Z=Z3))
    assert out3.shape == (K3, N3, T3, Tz3)
    assert jnp.allclose(out3, _reference(X3, ls3, Z3), atol=1e-4, rtol=1e-4), "K(X,Z) mismatch"

    # 4) diag path returns ones (no kernel needed)
    diag_out = squared_exponential(X, ls, diag=True)
    assert diag_out.shape == (K, N, T)
    assert jnp.allclose(diag_out, 1.0)

    # 5) fold path with grid-level T tiling (T large enough that blocks are split over T)
    K4, N4, T4, Tz4 = 1, 128, 256, 64
    X4 = jax.random.normal(keys[7], (K4, N4, T4, D), dtype=jnp.float32)
    Z4 = jax.random.normal(keys[8], (K4, N4, Tz4, D), dtype=jnp.float32)
    ls4 = make_lengthscale(keys[9], N4, D)
    out4 = jax.block_until_ready(squared_exponential(X4, ls4, Z=Z4))
    assert out4.shape == (K4, N4, T4, Tz4)
    assert jnp.allclose(out4, _reference(X4, ls4, Z4), atol=1e-4, rtol=1e-4), "T-tiled fold mismatch"

    # 6) wide path with T tiling (Tt multiple of 128 on the lane axis of X)
    K5, N5, T5, Tz5 = 1, 2, 256, 128
    X5 = jax.random.normal(jax.random.PRNGKey(11), (K5, N5, T5, D), dtype=jnp.float32)
    Z5 = jax.random.normal(jax.random.PRNGKey(12), (K5, N5, Tz5, D), dtype=jnp.float32)
    ls5 = make_lengthscale(jax.random.PRNGKey(13), N5, D)
    out5 = jax.block_until_ready(squared_exponential(X5, ls5, Z=Z5))
    assert out5.shape == (K5, N5, T5, Tz5)
    assert jnp.allclose(out5, _reference(X5, ls5, Z5), atol=1e-4, rtol=1e-4), "T-tiled wide mismatch"

    print("KERNEL_OK")
</pallas_src>

<mosaic_0001>
module attributes {stable_mosaic.version = 11 : i64} {
  func.func @_se_body_fold(%arg0: i32, %arg1: i32, %arg2: memref<1x3x16x8xf32, #tpu.memory_space<vmem>>, %arg3: memref<1x3x16x8xf32, #tpu.memory_space<vmem>>, %arg4: memref<1x3x1x8xf32, #tpu.memory_space<vmem>>, %arg5: memref<1x16x16x8xf32, #tpu.memory_space<vmem>>) attributes {dimension_semantics = [#tpu.dimension_semantics<parallel>, #tpu.dimension_semantics<parallel>], iteration_bounds = array<i64: 1, 1>, scalar_prefetch = 0 : i64, scratch_operands = 0 : i64, tpu.core_type = #tpu.core_type<tc>, window_params = [{transform_indices = @transform_0, window_bounds = array<i64: 1, 3, 16, 8>}, {transform_indices = @transform_1, window_bounds = array<i64: 1, 3, 16, 8>}, {transform_indices = @transform_2, window_bounds = array<i64: 1, 3, 1, 8>}, {transform_indices = @transform_3, window_bounds = array<i64: 1, 16, 16, 8>}]} {
    %c0 = arith.constant 0 : index
    %c0_0 = arith.constant 0 : index
    %c0_1 = arith.constant 0 : index
    %c0_2 = arith.constant 0 : index
    %0 = vector.load %arg4[%c0, %c0_0, %c0_1, %c0_2] : memref<1x3x1x8xf32, #tpu.memory_space<vmem>>, vector<1x1x1x8xf32>
    %1 = vector.shape_cast %0 : vector<1x1x1x8xf32> to vector<1x8xf32>
    %c0_3 = arith.constant 0 : index
    %c1 = arith.constant 1 : index
    %c0_4 = arith.constant 0 : index
    %c0_5 = arith.constant 0 : index
    %2 = vector.load %arg4[%c0_3, %c1, %c0_4, %c0_5] : memref<1x3x1x8xf32, #tpu.memory_space<vmem>>, vector<1x1x1x8xf32>
    %3 = vector.shape_cast %2 : vector<1x1x1x8xf32> to vector<1x8xf32>
    %c0_6 = arith.constant 0 : index
    %c2 = arith.constant 2 : index
    %c0_7 = arith.constant 0 : index
    %c0_8 = arith.constant 0 : index
    %4 = vector.load %arg4[%c0_6, %c2, %c0_7, %c0_8] : memref<1x3x1x8xf32, #tpu.memory_space<vmem>>, vector<1x1x1x8xf32>
    %5 = vector.shape_cast %4 : vector<1x1x1x8xf32> to vector<1x8xf32>
    %c0_9 = arith.constant 0 : index
    %c0_10 = arith.constant 0 : index
    %c0_11 = arith.constant 0 : index
    %c0_12 = arith.constant 0 : index
    %6 = vector.load %arg3[%c0_9, %c0_10, %c0_11, %c0_12] : memref<1x3x16x8xf32, #tpu.memory_space<vmem>>, vector<1x1x16x8xf32>
    %7 = vector.shape_cast %6 : vector<1x1x16x8xf32> to vector<16x8xf32>
    %8 = vector.broadcast %1 : vector<1x8xf32> to vector<16x8xf32>
    %9 = arith.mulf %7, %8 : vector<16x8xf32>
    %c0_13 = arith.constant 0 : index
    %c1_14 = arith.constant 1 : index
    %c0_15 = arith.constant 0 : index
    %c0_16 = arith.constant 0 : index
    %10 = vector.load %arg3[%c0_13, %c1_14, %c0_15, %c0_16] : memref<1x3x16x8xf32, #tpu.memory_space<vmem>>, vector<1x1x16x8xf32>
    %11 = vector.shape_cast %10 : vector<1x1x16x8xf32> to vector<16x8xf32>
    %12 = vector.broadcast %3 : vector<1x8xf32> to vector<16x8xf32>
    %13 = arith.mulf %11, %12 : vector<16x8xf32>
    %c0_17 = arith.constant 0 : index
    %c2_18 = arith.constant 2 : index
    %c0_19 = arith.constant 0 : index
    %c0_20 = arith.constant 0 : index
    %14 = vector.load %arg3[%c0_17, %c2_18, %c0_19, %c0_20] : memref<1x3x16x8xf32, #tpu.memory_space<vmem>>, vector<1x1x16x8xf32>
    %15 = vector.shape_cast %14 : vector<1x1x16x8xf32> to vector<16x8xf32>
    %16 = vector.broadcast %5 : vector<1x8xf32> to vector<16x8xf32>
    %17 = arith.mulf %15, %16 : vector<16x8xf32>
    %cst = arith.constant 0.000000e+00 : f32
    %18 = vector.broadcast %cst : f32 to vector<16x16x8xf32>
    %c0_21 = arith.constant 0 : index
    %c0_22 = arith.constant 0 : index
    %c0_23 = arith.constant 0 : index
    %c0_24 = arith.constant 0 : index
    %19 = vector.load %arg2[%c0_21, %c0_22, %c0_23, %c0_24] : memref<1x3x16x8xf32, #tpu.memory_space<vmem>>, vector<1x1x16x8xf32>
    %20 = vector.shape_cast %19 : vector<1x1x16x8xf32> to vector<16x8xf32>
    %21 = vector.broadcast %1 : vector<1x8xf32> to vector<16x8xf32>
    %22 = arith.mulf %20, %21 : vector<16x8xf32>
    %23 = vector.shape_cast %22 : vector<16x8xf32> to vector<16x1x8xf32>
    %24 = vector.shape_cast %9 : vector<16x8xf32> to vector<1x16x8xf32>
    %25 = vector.broadcast %23 : vector<16x1x8xf32> to vector<16x16x8xf32>
    %26 = vector.broadcast %24 : vector<1x16x8xf32> to vector<16x16x8xf32>
    %27 = arith.subf %25, %26 : vector<16x16x8xf32>
    %28 = arith.mulf %27, %27 : vector<16x16x8xf32>
    %29 = arith.subf %18, %28 : vector<16x16x8xf32>
    %c0_25 = arith.constant 0 : index
    %c1_26 = arith.constant 1 : index
    %c0_27 = arith.constant 0 : index
    %c0_28 = arith.constant 0 : index
    %30 = vector.load %arg2[%c0_25, %c1_26, %c0_27, %c0_28] : memref<1x3x16x8xf32, #tpu.memory_space<vmem>>, vector<1x1x16x8xf32>
    %31 = vector.shape_cast %30 : vector<1x1x16x8xf32> to vector<16x8xf32>
    %32 = vector.broadcast %3 : vector<1x8xf32> to vector<16x8xf32>
    %33 = arith.mulf %31, %32 : vector<16x8xf32>
    %34 = vector.shape_cast %33 : vector<16x8xf32> to vector<16x1x8xf32>
    %35 = vector.shape_cast %13 : vector<16x8xf32> to vector<1x16x8xf32>
    %36 = vector.broadcast %34 : vector<16x1x8xf32> to vector<16x16x8xf32>
    %37 = vector.broadcast %35 : vector<1x16x8xf32> to vector<16x16x8xf32>
    %38 = arith.subf %36, %37 : vector<16x16x8xf32>
    %39 = arith.mulf %38, %38 : vector<16x16x8xf32>
    %40 = arith.subf %29, %39 : vector<16x16x8xf32>
    %c0_29 = arith.constant 0 : index
    %c2_30 = arith.constant 2 : index
    %c0_31 = arith.constant 0 : index
    %c0_32 = arith.constant 0 : index
    %41 = vector.load %arg2[%c0_29, %c2_30, %c0_31, %c0_32] : memref<1x3x16x8xf32, #tpu.memory_space<vmem>>, vector<1x1x16x8xf32>
    %42 = vector.shape_cast %41 : vector<1x1x16x8xf32> to vector<16x8xf32>
    %43 = vector.broadcast %5 : vector<1x8xf32> to vector<16x8xf32>
    %44 = arith.mulf %42, %43 : vector<16x8xf32>
    %45 = vector.shape_cast %44 : vector<16x8xf32> to vector<16x1x8xf32>
    %46 = vector.shape_cast %17 : vector<16x8xf32> to vector<1x16x8xf32>
    %47 = vector.broadcast %45 : vector<16x1x8xf32> to vector<16x16x8xf32>
    %48 = vector.broadcast %46 : vector<1x16x8xf32> to vector<16x16x8xf32>
    %49 = arith.subf %47, %48 : vector<16x16x8xf32>
    %50 = arith.mulf %49, %49 : vector<16x16x8xf32>
    %51 = arith.subf %40, %50 : vector<16x16x8xf32>
    %52 = math.exp %51 : vector<16x16x8xf32>
    %c0_33 = arith.constant 0 : index
    %c0_34 = arith.constant 0 : index
    %c0_35 = arith.constant 0 : index
    %c0_36 = arith.constant 0 : index
    %53 = vector.load %arg5[%c0_33, %c0_34, %c0_35, %c0_36] : memref<1x16x16x8xf32, #tpu.memory_space<vmem>>, vector<1x16x16x8xf32>
    %54 = vector.shape_cast %53 : vector<1x16x16x8xf32> to vector<16x16x8xf32>
    %55 = vector.shape_cast %52 : vector<16x16x8xf32> to vector<1x16x16x8xf32>
    tpu.vector_store %arg5[%c0_33, %c0_34, %c0_35, %c0_36], %55 {strides = array<i32>} : memref<1x16x16x8xf32, #tpu.memory_space<vmem>>, vector<1x16x16x8xf32>,
    return
  }
  func.func @transform_0(%arg0: i32, %arg1: i32) -> (i32, i32, i32, i32) {
    %c0_i32 = arith.constant 0 : i32
    %c0_i32_0 = arith.constant 0 : i32
    %c0_i32_1 = arith.constant 0 : i32
    return %arg0, %c0_i32, %arg1, %c0_i32_0 : i32, i32, i32, i32
  }
  func.func @transform_1(%arg0: i32, %arg1: i32) -> (i32, i32, i32, i32) {
    %c0_i32 = arith.constant 0 : i32
    %c0_i32_0 = arith.constant 0 : i32
    %c0_i32_1 = arith.constant 0 : i32
    %c0_i32_2 = arith.constant 0 : i32
    return %arg0, %c0_i32, %c0_i32_0, %c0_i32_1 : i32, i32, i32, i32
  }
  func.func @transform_2(%arg0: i32, %arg1: i32) -> (i32, i32, i32, i32) {
    %c0_i32 = arith.constant 0 : i32
    %c0_i32_0 = arith.constant 0 : i32
    %c0_i32_1 = arith.constant 0 : i32
    %c0_i32_2 = arith.constant 0 : i32
    return %arg0, %c0_i32, %c0_i32_0, %c0_i32_1 : i32, i32, i32, i32
  }
  func.func @transform_3(%arg0: i32, %arg1: i32) -> (i32, i32, i32, i32) {
    %c0_i32 = arith.constant 0 : i32
    %c0_i32_0 = arith.constant 0 : i32
    %c0_i32_1 = arith.constant 0 : i32
    return %arg0, %arg1, %c0_i32, %c0_i32_0 : i32, i32, i32, i32
  }
}

</mosaic_0001>

<llo_original>
// kernel: tpu_custom_call.1
$region0: #{tpu_custom_call.1}
  #allocation0 [shape = 'u32[]', space=smem, size = 0x4, offset = 0x4, fixed_abs, tag = 'smem constant byte address 0x4 - core index']
  #allocation1 [shape = 'u32[144,128]{1,0:T(1,128)}', space=vmem, size = 0x12000, scoped, tag = 'internal scratch']
  %s0 = inlined_call_operand.vmem [shape: f32[1,3,16,8], index: 0, kind: input, shape index: {}]
  %s1 = inlined_call_operand.vmem [shape: f32[1,3,16,8], index: 1, kind: input, shape index: {}]
  %s2 = inlined_call_operand.vmem [shape: f32[1,3,1,8], index: 2, kind: input, shape index: {}]
  %s3 = inlined_call_operand.vmem [shape: f32[1,16,16,8], index: 3, kind: output, shape index: {}]
  %s4 = sld [smem:[#allocation0]]
  $region22: #{tpu_custom_call.1} parent=0
    _
  %s6 = ssub.s32 1, %s4
  %s7 = scalar_select 0, %s6, %s4
  // Predicated region
  $region2: #{tpu_custom_call.1} parent=0 // pred_check
    _
  $region3: #{tpu_custom_call.1} parent=0 // pred_check_branch
    %9 = sbr.rel (0) target = $region5
  $region4: #{tpu_custom_call.1} parent=0 // pred_region
    _
  $region5: #{tpu_custom_call.1} parent=0 // pred_fallthru
    _
  // Predicated region
  $region6: #{tpu_custom_call.1} parent=0 // pred_check
    _
  $region7: #{tpu_custom_call.1} parent=0 // pred_check_branch
    %11 = sbr.rel (0) target = $region9
  $region8: #{tpu_custom_call.1} parent=0 // pred_region
    _
  $region9: #{tpu_custom_call.1} parent=0 // pred_fallthru
    _
  // Predicated region
  $region10: #{tpu_custom_call.1} parent=0 // pred_check
    _
  $region11: #{tpu_custom_call.1} parent=0 // pred_check_branch
    %13 = sbr.rel (0) target = $region13
  $region12: #{tpu_custom_call.1} parent=0 // pred_region
    _
  $region13: #{tpu_custom_call.1} parent=0 // pred_fallthru
    _
  %v14 = vld [vmem:[%s2] sm:$0x1]
  %s15 = scalar_lea.vmem %s2, 1
  %v16 = vld [vmem:[%s15] sm:$0x1]
  %s17 = scalar_lea.vmem %s2, 2
  %v18 = vld [vmem:[%s17] sm:$0x1]
  %v19 = vld [vmem:[%s1] sm:$0xff]
  %v20 = vld [vmem:[%s1 + $0x8] sm:$0xff]
  %v22 = vlaneseq
  %v23 = vshrl.u32 %v22, 7
  %v24 = vsub.s32 0, %v23
  %v25 = vrot.slane %v14, %v24
  %v27 = vmul.f32 %v19, %v25
  %v28 = vmul.f32 %v20, %v25
  %s29 = scalar_lea.vmem %s1, 16
  %v30 = vld [vmem:[%s29] sm:$0xff]
  %v31 = vld [vmem:[%s29 + $0x8] sm:$0xff]
  %v33 = vlaneseq
  %v34 = vshrl.u32 %v33, 7
  %v35 = vsub.s32 0, %v34
  %v36 = vrot.slane %v16, %v35
  %v38 = vmul.f32 %v30, %v36
  %v39 = vmul.f32 %v31, %v36
  %s40 = scalar_lea.vmem %s1, 32
  %v41 = vld [vmem:[%s40] sm:$0xff]
  %v42 = vld [vmem:[%s40 + $0x8] sm:$0xff]
  %v44 = vlaneseq
  %v45 = vshrl.u32 %v44, 7
  %v46 = vsub.s32 0, %v45
  %v47 = vrot.slane %v18, %v46
  %v49 = vmul.f32 %v41, %v47
  %v50 = vmul.f32 %v42, %v47
  %v51 = vld [vmem:[%s0] sm:$0xff]
  %v52 = vld [vmem:[%s0 + $0x8] sm:$0xff]
  %v53 = vmul.f32 %v51, %v25
  %v54 = vmul.f32 %v52, %v25
  %v57 = vcombine.high %v53, %v53
  %v59 = vunpack.c.l.s4 1966171168
  %v60 = vunpack.c.0.s8 %v59
  %v61 = vlaneseq
  %v62 = vshrl.u32 %v61, 7
  %v63 = vsub.s32 %v60, %v62
  %v64 = vrot.slane %v53, %v63
  %v66 = vunpack.c.l.s4 1966171168
  %v67 = vunpack.c.0.s8 %v66
  %v68 = vlaneseq
  %v69 = vshrl.u32 %v68, 7
  %v70 = vsub.s32 %v67, %v69
  %v71 = vrot.slane %v57, %v70
  %v72 = vcombine.high %v64, %v64
  %v73 = vcombine.high %v71, %v71
  %v75 = vunpack.c.l.s4 1966171168
  %v76 = vunpack.c.0.s8 %v75
  %v77 = vlaneseq
  %v78 = vshrl.u32 %v77, 7
  %v79 = vsub.s32 %v76, %v78
  %v80 = vrot.slane %v64, %v79
  %v82 = vunpack.c.l.s4 1966171168
  %v83 = vunpack.c.0.s8 %v82
  %v84 = vlaneseq
  %v85 = vshrl.u32 %v84, 7
  %v86 = vsub.s32 %v83, %v85
  %v87 = vrot.slane %v71, %v86
  %v89 = vunpack.c.l.s4 1966171168
  %v90 = vunpack.c.0.s8 %v89
  %v91 = vlaneseq
  %v92 = vshrl.u32 %v91, 7
  %v93 = vsub.s32 %v90, %v92
  %v94 = vrot.slane %v72, %v93
  %v96 = vunpack.c.l.s4 1966171168
  %v97 = vunpack.c.0.s8 %v96
  %v98 = vlaneseq
  %v99 = vshrl.u32 %v98, 7
  %v100 = vsub.s32 %v97, %v99
  %v101 = vrot.slane %v73, %v100
  %v102 = vcombine.high %v80, %v80
  %v103 = vcombine.high %v87, %v87
  %v104 = vcombine.high %v94, %v94
  %v105 = vcombine.high %v101, %v101
  %v106 = vcombine.high %v54, %v54
  %v108 = vunpack.c.l.s4 1966171168
  %v109 = vunpack.c.0.s8 %v108
  %v110 = vlaneseq
  %v111 = vshrl.u32 %v110, 7
  %v112 = vsub.s32 %v109, %v111
  %v113 = vrot.slane %v54, %v112
  %v115 = vunpack.c.l.s4 1966171168
  %v116 = vunpack.c.0.s8 %v115
  %v117 = vlaneseq
  %v118 = vshrl.u32 %v117, 7
  %v119 = vsub.s32 %v116, %v118
  %v120 = vrot.slane %v106, %v119
  %v121 = vcombine.high %v113, %v113
  %v122 = vcombine.high %v120, %v120
  %v124 = vunpack.c.l.s4 1966171168
  %v125 = vunpack.c.0.s8 %v124
  %v126 = vlaneseq
  %v127 = vshrl.u32 %v126, 7
  %v128 = vsub.s32 %v125, %v127
  %v129 = vrot.slane %v113, %v128
  %v131 = vunpack.c.l.s4 1966171168
  %v132 = vunpack.c.0.s8 %v131
  %v133 = vlaneseq
  %v134 = vshrl.u32 %v133, 7
  %v135 = vsub.s32 %v132, %v134
  %v136 = vrot.slane %v120, %v135
  %v138 = vunpack.c.l.s4 1966171168
  %v139 = vunpack.c.0.s8 %v138
  %v140 = vlaneseq
  %v141 = vshrl.u32 %v140, 7
  %v142 = vsub.s32 %v139, %v141
  %v143 = vrot.slane %v121, %v142
  %v145 = vunpack.c.l.s4 1966171168
  %v146 = vunpack.c.0.s8 %v145
  %v147 = vlaneseq
  %v148 = vshrl.u32 %v147, 7
  %v149 = vsub.s32 %v146, %v148
  %v150 = vrot.slane %v122, %v149
  %v151 = vcombine.high %v129, %v129
  %v152 = vcombine.high %v136, %v136
  %v153 = vcombine.high %v143, %v143
  %v154 = vcombine.high %v150, %v150
  %v155 = vlaneseq
  %v156 = vshrl.u32 %v155, 7
  %v157 = vsub.s32 0, %v156
  %v158 = vrot.slane %v80, %v157
  %v159 = vlaneseq
  %v160 = vshrl.u32 %v159, 7
  %v161 = vsub.s32 0, %v160
  %v162 = vrot.slane %v94, %v161
  %v163 = vlaneseq
  %v164 = vshrl.u32 %v163, 7
  %v165 = vsub.s32 0, %v164
  %v166 = vrot.slane %v102, %v165
  %v167 = vlaneseq
  %v168 = vshrl.u32 %v167, 7
  %v169 = vsub.s32 0, %v168
  %v170 = vrot.slane %v104, %v169
  %v171 = vlaneseq
  %v172 = vshrl.u32 %v171, 7
  %v173 = vsub.s32 0, %v172
  %v174 = vrot.slane %v87, %v173
  %v175 = vlaneseq
  %v176 = vshrl.u32 %v175, 7
  %v177 = vsub.s32 0, %v176
  %v178 = vrot.slane %v101, %v177
  %v179 = vlaneseq
  %v180 = vshrl.u32 %v179, 7
  %v181 = vsub.s32 0, %v180
  %v182 = vrot.slane %v103, %v181
  %v183 = vlaneseq
  %v184 = vshrl.u32 %v183, 7
  %v185 = vsub.s32 0, %v184
  %v186 = vrot.slane %v105, %v185
  %v187 = vlaneseq
  %v188 = vshrl.u32 %v187, 7
  %v189 = vsub.s32 0, %v188
  %v190 = vrot.slane %v129, %v189
  %v191 = vlaneseq
  %v192 = vshrl.u32 %v191, 7
  %v193 = vsub.s32 0, %v192
  %v194 = vrot.slane %v143, %v193
  %v195 = vlaneseq
  %v196 = vshrl.u32 %v195, 7
  %v197 = vsub.s32 0, %v196
  %v198 = vrot.slane %v151, %v197
  %v199 = vlaneseq
  %v200 = vshrl.u32 %v199, 7
  %v201 = vsub.s32 0, %v200
  %v202 = vrot.slane %v153, %v201
  %v203 = vlaneseq
  %v204 = vshrl.u32 %v203, 7
  %v205 = vsub.s32 0, %v204
  %v206 = vrot.slane %v136, %v205
  %v207 = vlaneseq
  %v208 = vshrl.u32 %v207, 7
  %v209 = vsub.s32 0, %v208
  %v210 = vrot.slane %v150, %v209
  %v211 = vlaneseq
  %v212 = vshrl.u32 %v211, 7
  %v213 = vsub.s32 0, %v212
  %v214 = vrot.slane %v152, %v213
  %v215 = vlaneseq
  %v216 = vshrl.u32 %v215, 7
  %v217 = vsub.s32 0, %v216
  %v218 = vrot.slane %v154, %v217
  %v235 = vsub.f32 %v158, %v27
  %v236 = vsub.f32 %v158, %v28
  %v237 = vsub.f32 %v162, %v27
  %v238 = vsub.f32 %v162, %v28
  %v239 = vsub.f32 %v166, %v27
  %v240 = vsub.f32 %v166, %v28
  %v241 = vsub.f32 %v170, %v27
  %v242 = vsub.f32 %v170, %v28
  %v243 = vsub.f32 %v174, %v27
  %v244 = vsub.f32 %v174, %v28
  %v245 = vsub.f32 %v178, %v27
  %v246 = vsub.f32 %v178, %v28
  %v247 = vsub.f32 %v182, %v27
  %v248 = vsub.f32 %v182, %v28
  %v249 = vsub.f32 %v186, %v27
  %v250 = vsub.f32 %v186, %v28
  %v251 = vsub.f32 %v190, %v27
  %v252 = vsub.f32 %v190, %v28
  %v253 = vsub.f32 %v194, %v27
  %v254 = vsub.f32 %v194, %v28
  %v255 = vsub.f32 %v198, %v27
  %v256 = vsub.f32 %v198, %v28
  %v257 = vsub.f32 %v202, %v27
  %v258 = vsub.f32 %v202, %v28
  %v259 = vsub.f32 %v206, %v27
  %v260 = vsub.f32 %v206, %v28
  %v261 = vsub.f32 %v210, %v27
  %v262 = vsub.f32 %v210, %v28
  %v263 = vsub.f32 %v214, %v27
  %v264 = vsub.f32 %v214, %v28
  %v265 = vsub.f32 %v218, %v27
  %v266 = vsub.f32 %v218, %v28
  %v267 = vmul.f32 %v235, %v235
  %v268 = vmul.f32 %v236, %v236
  %v269 = vmul.f32 %v237, %v237
  %v270 = vmul.f32 %v238, %v238
  %v271 = vmul.f32 %v239, %v239
  %v272 = vmul.f32 %v240, %v240
  %v273 = vmul.f32 %v241, %v241
  %v274 = vmul.f32 %v242, %v242
  %v275 = vmul.f32 %v243, %v243
  %v276 = vmul.f32 %v244, %v244
  %v277 = vmul.f32 %v245, %v245
  %v278 = vmul.f32 %v246, %v246
  %v279 = vmul.f32 %v247, %v247
  %v280 = vmul.f32 %v248, %v248
  %v281 = vmul.f32 %v249, %v249
  %v282 = vmul.f32 %v250, %v250
  %v283 = vmul.f32 %v251, %v251
  %v284 = vmul.f32 %v252, %v252
  %v285 = vmul.f32 %v253, %v253
  %v286 = vmul.f32 %v254, %v254
  %v287 = vmul.f32 %v255, %v255
  %v288 = vmul.f32 %v256, %v256
  %v289 = vmul.f32 %v257, %v257
  %v290 = vmul.f32 %v258, %v258
  %v291 = vmul.f32 %v259, %v259
  %v292 = vmul.f32 %v260, %v260
  %v293 = vmul.f32 %v261, %v261
  %v294 = vmul.f32 %v262, %v262
  %v295 = vmul.f32 %v263, %v263
  %v296 = vmul.f32 %v264, %v264
  %v297 = vmul.f32 %v265, %v265
  %v298 = vmul.f32 %v266, %v266
  %v299 = vsub.f32 0.0, %v267
  %v300 = vsub.f32 0.0, %v268
  %v301 = vsub.f32 0.0, %v269
  %v302 = vsub.f32 0.0, %v270
  %v303 = vsub.f32 0.0, %v271
  %v304 = vsub.f32 0.0, %v272
  %v305 = vsub.f32 0.0, %v273
  %v306 = vsub.f32 0.0, %v274
  %v307 = vsub.f32 0.0, %v275
  %v308 = vsub.f32 0.0, %v276
  %v309 = vsub.f32 0.0, %v277
  %v310 = vsub.f32 0.0, %v278
  %v311 = vsub.f32 0.0, %v279
  %v312 = vsub.f32 0.0, %v280
  %v313 = vsub.f32 0.0, %v281
  %v314 = vsub.f32 0.0, %v282
  %v315 = vsub.f32 0.0, %v283
  %v316 = vsub.f32 0.0, %v284
  %v317 = vsub.f32 0.0, %v285
  %v318 = vsub.f32 0.0, %v286
  %v319 = vsub.f32 0.0, %v287
  %v320 = vsub.f32 0.0, %v288
  %v321 = vsub.f32 0.0, %v289
  %v322 = vsub.f32 0.0, %v290
  %v323 = vsub.f32 0.0, %v291
  %v324 = vsub.f32 0.0, %v292
  %v325 = vsub.f32 0.0, %v293
  %v326 = vsub.f32 0.0, %v294
  %v327 = vsub.f32 0.0, %v295
  %v328 = vsub.f32 0.0, %v296
  %v329 = vsub.f32 0.0, %v297
  %v330 = vsub.f32 0.0, %v298
  %s331 = scalar_lea.vmem %s0, 16
  %v332 = vld [vmem:[%s331] sm:$0xff]
  %v333 = vld [vmem:[%s331 + $0x8] sm:$0xff]
  %v334 = vmul.f32 %v332, %v36
  %v335 = vmul.f32 %v333, %v36
  %v338 = vcombine.high %v334, %v334
  %v340 = vunpack.c.l.s4 1966171168
  %v341 = vunpack.c.0.s8 %v340
  %v342 = vlaneseq
  %v343 = vshrl.u32 %v342, 7
  %v344 = vsub.s32 %v341, %v343
  %v345 = vrot.slane %v334, %v344
  %v347 = vunpack.c.l.s4 1966171168
  %v348 = vunpack.c.0.s8 %v347
  %v349 = vlaneseq
  %v350 = vshrl.u32 %v349, 7
  %v351 = vsub.s32 %v348, %v350
  %v352 = vrot.slane %v338, %v351
  %v353 = vcombine.high %v345, %v345
  %v354 = vcombine.high %v352, %v352
  %v356 = vunpack.c.l.s4 1966171168
  %v357 = vunpack.c.0.s8 %v356
  %v358 = vlaneseq
  %v359 = vshrl.u32 %v358, 7
  %v360 = vsub.s32 %v357, %v359
  %v361 = vrot.slane %v345, %v360
  %v363 = vunpack.c.l.s4 1966171168
  %v364 = vunpack.c.0.s8 %v363
  %v365 = vlaneseq
  %v366 = vshrl.u32 %v365, 7
  %v367 = vsub.s32 %v364, %v366
  %v368 = vrot.slane %v352, %v367
  %v370 = vunpack.c.l.s4 1966171168
  %v371 = vunpack.c.0.s8 %v370
  %v372 = vlaneseq
  %v373 = vshrl.u32 %v372, 7
  %v374 = vsub.s32 %v371, %v373
  %v375 = vrot.slane %v353, %v374
  %v377 = vunpack.c.l.s4 1966171168
  %v378 = vunpack.c.0.s8 %v377
  %v379 = vlaneseq
  %v380 = vshrl.u32 %v379, 7
  %v381 = vsub.s32 %v378, %v380
  %v382 = vrot.slane %v354, %v381
  %v383 = vcombine.high %v361, %v361
  %v384 = vcombine.high %v368, %v368
  %v385 = vcombine.high %v375, %v375
  %v386 = vcombine.high %v382, %v382
  %v387 = vcombine.high %v335, %v335
  %v389 = vunpack.c.l.s4 1966171168
  %v390 = vunpack.c.0.s8 %v389
  %v391 = vlaneseq
  %v392 = vshrl.u32 %v391, 7
  %v393 = vsub.s32 %v390, %v392
  %v394 = vrot.slane %v335, %v393
  %v396 = vunpack.c.l.s4 1966171168
  %v397 = vunpack.c.0.s8 %v396
  %v398 = vlaneseq
  %v399 = vshrl.u32 %v398, 7
  %v400 = vsub.s32 %v397, %v399
  %v401 = vrot.slane %v387, %v400
  %v402 = vcombine.high %v394, %v394
  %v403 = vcombine.high %v401, %v401
  %v405 = vunpack.c.l.s4 1966171168
  %v406 = vunpack.c.0.s8 %v405
  %v407 = vlaneseq
  %v408 = vshrl.u32 %v407, 7
  %v409 = vsub.s32 %v406, %v408
  %v410 = vrot.slane %v394, %v409
  %v412 = vunpack.c.l.s4 1966171168
  %v413 = vunpack.c.0.s8 %v412
  %v414 = vlaneseq
  %v415 = vshrl.u32 %v414, 7
  %v416 = vsub.s32 %v413, %v415
  %v417 = vrot.slane %v401, %v416
  %v419 = vunpack.c.l.s4 1966171168
  %v420 = vunpack.c.0.s8 %v419
  %v421 = vlaneseq
  %v422 = vshrl.u32 %v421, 7
  %v423 = vsub.s32 %v420, %v422
  %v424 = vrot.slane %v402, %v423
  %v426 = vunpack.c.l.s4 1966171168
  %v427 = vunpack.c.0.s8 %v426
  %v428 = vlaneseq
  %v429 = vshrl.u32 %v428, 7
  %v430 = vsub.s32 %v427, %v429
  %v431 = vrot.slane %v403, %v430
  %v432 = vcombine.high %v410, %v410
  %v433 = vcombine.high %v417, %v417
  %v434 = vcombine.high %v424, %v424
  %v435 = vcombine.high %v431, %v431
  %v436 = vlaneseq
  %v437 = vshrl.u32 %v436, 7
  %v438 = vsub.s32 0, %v437
  %v439 = vrot.slane %v361, %v438
  %v440 = vlaneseq
  %v441 = vshrl.u32 %v440, 7
  %v442 = vsub.s32 0, %v441
  %v443 = vrot.slane %v375, %v442
  %v444 = vlaneseq
  %v445 = vshrl.u32 %v444, 7
  %v446 = vsub.s32 0, %v445
  %v447 = vrot.slane %v383, %v446
  %v448 = vlaneseq
  %v449 = vshrl.u32 %v448, 7
  %v450 = vsub.s32 0, %v449
  %v451 = vrot.slane %v385, %v450
  %v452 = vlaneseq
  %v453 = vshrl.u32 %v452, 7
  %v454 = vsub.s32 0, %v453
  %v455 = vrot.slane %v368, %v454
  %v456 = vlaneseq
  %v457 = vshrl.u32 %v456, 7
  %v458 = vsub.s32 0, %v457
  %v459 = vrot.slane %v382, %v458
  %v460 = vlaneseq
  %v461 = vshrl.u32 %v460, 7
  %v462 = vsub.s32 0, %v461
  %v463 = vrot.slane %v384, %v462
  %v464 = vlaneseq
  %v465 = vshrl.u32 %v464, 7
  %v466 = vsub.s32 0, %v465
  %v467 = vrot.slane %v386, %v466
  %v468 = vlaneseq
  %v469 = vshrl.u32 %v468, 7
  %v470 = vsub.s32 0, %v469
  %v471 = vrot.slane %v410, %v470
  %v472 = vlaneseq
  %v473 = vshrl.u32 %v472, 7
  %v474 = vsub.s32 0, %v473
  %v475 = vrot.slane %v424, %v474
  %v476 = vlaneseq
  %v477 = vshrl.u32 %v476, 7
  %v478 = vsub.s32 0, %v477
  %v479 = vrot.slane %v432, %v478
  %v480 = vlaneseq
  %v481 = vshrl.u32 %v480, 7
  %v482 = vsub.s32 0, %v481
  %v483 = vrot.slane %v434, %v482
  %v484 = vlaneseq
  %v485 = vshrl.u32 %v484, 7
  %v486 = vsub.s32 0, %v485
  %v487 = vrot.slane %v417, %v486
  %v488 = vlaneseq
  %v489 = vshrl.u32 %v488, 7
  %v490 = vsub.s32 0, %v489
  %v491 = vrot.slane %v431, %v490
  %v492 = vlaneseq
  %v493 = vshrl.u32 %v492, 7
  %v494 = vsub.s32 0, %v493
  %v495 = vrot.slane %v433, %v494
  %v496 = vlaneseq
  %v497 = vshrl.u32 %v496, 7
  %v498 = vsub.s32 0, %v497
  %v499 = vrot.slane %v435, %v498
  %v516 = vsub.f32 %v439, %v38
  %v517 = vsub.f32 %v439, %v39
  %v518 = vsub.f32 %v443, %v38
  %v519 = vsub.f32 %v443, %v39
  %v520 = vsub.f32 %v447, %v38
  %v521 = vsub.f32 %v447, %v39
  %v522 = vsub.f32 %v451, %v38
  %v523 = vsub.f32 %v451, %v39
  %v524 = vsub.f32 %v455, %v38
  %v525 = vsub.f32 %v455, %v39
  %v526 = vsub.f32 %v459, %v38
  %v527 = vsub.f32 %v459, %v39
  %v528 = vsub.f32 %v463, %v38
  %v529 = vsub.f32 %v463, %v39
  %v530 = vsub.f32 %v467, %v38
  %v531 = vsub.f32 %v467, %v39
  %v532 = vsub.f32 %v471, %v38
  %v533 = vsub.f32 %v471, %v39
  %v534 = vsub.f32 %v475, %v38
  %v535 = vsub.f32 %v475, %v39
  %v536 = vsub.f32 %v479, %v38
  %v537 = vsub.f32 %v479, %v39
  %v538 = vsub.f32 %v483, %v38
  %v539 = vsub.f32 %v483, %v39
  %v540 = vsub.f32 %v487, %v38
  %v541 = vsub.f32 %v487, %v39
  %v542 = vsub.f32 %v491, %v38
  %v543 = vsub.f32 %v491, %v39
  %v544 = vsub.f32 %v495, %v38
  %v545 = vsub.f32 %v495, %v39
  %v546 = vsub.f32 %v499, %v38
  %v547 = vsub.f32 %v499, %v39
  %v548 = vmul.f32 %v516, %v516
  %v549 = vmul.f32 %v517, %v517
  %v550 = vmul.f32 %v518, %v518
  %v551 = vmul.f32 %v519, %v519
  %v552 = vmul.f32 %v520, %v520
  %v553 = vmul.f32 %v521, %v521
  %v554 = vmul.f32 %v522, %v522
  %v555 = vmul.f32 %v523, %v523
  %v556 = vmul.f32 %v524, %v524
  %v557 = vmul.f32 %v525, %v525
  %v558 = vmul.f32 %v526, %v526
  %v559 = vmul.f32 %v527, %v527
  %v560 = vmul.f32 %v528, %v528
  %v561 = vmul.f32 %v529, %v529
  %v562 = vmul.f32 %v530, %v530
  %v563 = vmul.f32 %v531, %v531
  %v564 = vmul.f32 %v532, %v532
  %v565 = vmul.f32 %v533, %v533
  %v566 = vmul.f32 %v534, %v534
  %v567 = vmul.f32 %v535, %v535
  %v568 = vmul.f32 %v536, %v536
  %v569 = vmul.f32 %v537, %v537
  %v570 = vmul.f32 %v538, %v538
  %v571 = vmul.f32 %v539, %v539
  %v572 = vmul.f32 %v540, %v540
  %v573 = vmul.f32 %v541, %v541
  %v574 = vmul.f32 %v542, %v542
  %v575 = vmul.f32 %v543, %v543
  %v576 = vmul.f32 %v544, %v544
  %v577 = vmul.f32 %v545, %v545
  %v578 = vmul.f32 %v546, %v546
  %v579 = vmul.f32 %v547, %v547
  %v580 = vsub.f32 %v299, %v548
  %v581 = vsub.f32 %v300, %v549
  %v582 = vsub.f32 %v301, %v550
  %v583 = vsub.f32 %v302, %v551
  %v584 = vsub.f32 %v303, %v552
  %v585 = vsub.f32 %v304, %v553
  %v586 = vsub.f32 %v305, %v554
  %v587 = vsub.f32 %v306, %v555
  %v588 = vsub.f32 %v307, %v556
  %v589 = vsub.f32 %v308, %v557
  %v590 = vsub.f32 %v309, %v558
  %v591 = vsub.f32 %v310, %v559
  %v592 = vsub.f32 %v311, %v560
  %v593 = vsub.f32 %v312, %v561
  %v594 = vsub.f32 %v313, %v562
  %v595 = vsub.f32 %v314, %v563
  %v596 = vsub.f32 %v315, %v564
  %v597 = vsub.f32 %v316, %v565
  %v598 = vsub.f32 %v317, %v566
  %v599 = vsub.f32 %v318, %v567
  %v600 = vsub.f32 %v319, %v568
  %v601 = vsub.f32 %v320, %v569
  %v602 = vsub.f32 %v321, %v570
  %v603 = vsub.f32 %v322, %v571
  %v604 = vsub.f32 %v323, %v572
  %v605 = vsub.f32 %v324, %v573
  %v606 = vsub.f32 %v325, %v574
  %v607 = vsub.f32 %v326, %v575
  %v608 = vsub.f32 %v327, %v576
  %v609 = vsub.f32 %v328, %v577
  %v610 = vsub.f32 %v329, %v578
  %v611 = vsub.f32 %v330, %v579
  %s612 = scalar_lea.vmem %s0, 32
  %v613 = vld [vmem:[%s612] sm:$0xff]
  %v614 = vld [vmem:[%s612 + $0x8] sm:$0xff]
  %v615 = vmul.f32 %v613, %v47
  %v616 = vmul.f32 %v614, %v47
  %v619 = vcombine.high %v615, %v615
  %v621 = vunpack.c.l.s4 1966171168
  %v622 = vunpack.c.0.s8 %v621
  %v623 = vlaneseq
  %v624 = vshrl.u32 %v623, 7
  %v625 = vsub.s32 %v622, %v624
  %v626 = vrot.slane %v615, %v625
  %v628 = vunpack.c.l.s4 1966171168
  %v629 = vunpack.c.0.s8 %v628
  %v630 = vlaneseq
  %v631 = vshrl.u32 %v630, 7
  %v632 = vsub.s32 %v629, %v631
  %v633 = vrot.slane %v619, %v632
  %v634 = vcombine.high %v626, %v626
  %v635 = vcombine.high %v633, %v633
  %v637 = vunpack.c.l.s4 1966171168
  %v638 = vunpack.c.0.s8 %v637
  %v639 = vlaneseq
  %v640 = vshrl.u32 %v639, 7
  %v641 = vsub.s32 %v638, %v640
  %v642 = vrot.slane %v626, %v641
  %v644 = vunpack.c.l.s4 1966171168
  %v645 = vunpack.c.0.s8 %v644
  %v646 = vlaneseq
  %v647 = vshrl.u32 %v646, 7
  %v648 = vsub.s32 %v645, %v647
  %v649 = vrot.slane %v633, %v648
  %v651 = vunpack.c.l.s4 1966171168
  %v652 = vunpack.c.0.s8 %v651
  %v653 = vlaneseq
  %v654 = vshrl.u32 %v653, 7
  %v655 = vsub.s32 %v652, %v654
  %v656 = vrot.slane %v634, %v655
  %v658 = vunpack.c.l.s4 1966171168
  %v659 = vunpack.c.0.s8 %v658
  %v660 = vlaneseq
  %v661 = vshrl.u32 %v660, 7
  %v662 = vsub.s32 %v659, %v661
  %v663 = vrot.slane %v635, %v662
  %v664 = vcombine.high %v642, %v642
  %v665 = vcombine.high %v649, %v649
  %v666 = vcombine.high %v656, %v656
  %v667 = vcombine.high %v663, %v663
  %v668 = vcombine.high %v616, %v616
  %v670 = vunpack.c.l.s4 1966171168
  %v671 = vunpack.c.0.s8 %v670
  %v672 = vlaneseq
  %v673 = vshrl.u32 %v672, 7
  %v674 = vsub.s32 %v671, %v673
  %v675 = vrot.slane %v616, %v674
  %v677 = vunpack.c.l.s4 1966171168
  %v678 = vunpack.c.0.s8 %v677
  %v679 = vlaneseq
  %v680 = vshrl.u32 %v679, 7
  %v681 = vsub.s32 %v678, %v680
  %v682 = vrot.slane %v668, %v681
  %v683 = vcombine.high %v675, %v675
  %v684 = vcombine.high %v682, %v682
  %v686 = vunpack.c.l.s4 1966171168
  %v687 = vunpack.c.0.s8 %v686
  %v688 = vlaneseq
  %v689 = vshrl.u32 %v688, 7
  %v690 = vsub.s32 %v687, %v689
  %v691 = vrot.slane %v675, %v690
  %v693 = vunpack.c.l.s4 1966171168
  %v694 = vunpack.c.0.s8 %v693
  %v695 = vlaneseq
  %v696 = vshrl.u32 %v695, 7
  %v697 = vsub.s32 %v694, %v696
  %v698 = vrot.slane %v682, %v697
  %v700 = vunpack.c.l.s4 1966171168
  %v701 = vunpack.c.0.s8 %v700
  %v702 = vlaneseq
  %v703 = vshrl.u32 %v702, 7
  %v704 = vsub.s32 %v701, %v703
  %v705 = vrot.slane %v683, %v704
  %v707 = vunpack.c.l.s4 1966171168
  %v708 = vunpack.c.0.s8 %v707
  %v709 = vlaneseq
  %v710 = vshrl.u32 %v709, 7
  %v711 = vsub.s32 %v708, %v710
  %v712 = vrot.slane %v684, %v711
  %v713 = vcombine.high %v691, %v691
  %v714 = vcombine.high %v698, %v698
  %v715 = vcombine.high %v705, %v705
  %v716 = vcombine.high %v712, %v712
  %v717 = vlaneseq
  %v718 = vshrl.u32 %v717, 7
  %v719 = vsub.s32 0, %v718
  %v720 = vrot.slane %v642, %v719
  %v721 = vlaneseq
  %v722 = vshrl.u32 %v721, 7
  %v723 = vsub.s32 0, %v722
  %v724 = vrot.slane %v656, %v723
  %v725 = vlaneseq
  %v726 = vshrl.u32 %v725, 7
  %v727 = vsub.s32 0, %v726
  %v728 = vrot.slane %v664, %v727
  %v729 = vlaneseq
  %v730 = vshrl.u32 %v729, 7
  %v731 = vsub.s32 0, %v730
  %v732 = vrot.slane %v666, %v731
  %v733 = vlaneseq
  %v734 = vshrl.u32 %v733, 7
  %v735 = vsub.s32 0, %v734
  %v736 = vrot.slane %v649, %v735
  %v737 = vlaneseq
  %v738 = vshrl.u32 %v737, 7
  %v739 = vsub.s32 0, %v738
  %v740 = vrot.slane %v663, %v739
  %v741 = vlaneseq
  %v742 = vshrl.u32 %v741, 7
  %v743 = vsub.s32 0, %v742
  %v744 = vrot.slane %v665, %v743
  %v745 = vlaneseq
  %v746 = vshrl.u32 %v745, 7
  %v747 = vsub.s32 0, %v746
  %v748 = vrot.slane %v667, %v747
  %v749 = vlaneseq
  %v750 = vshrl.u32 %v749, 7
  %v751 = vsub.s32 0, %v750
  %v752 = vrot.slane %v691, %v751
  %v753 = vlaneseq
  %v754 = vshrl.u32 %v753, 7
  %v755 = vsub.s32 0, %v754
  %v756 = vrot.slane %v705, %v755
  %v757 = vlaneseq
  %v758 = vshrl.u32 %v757, 7
  %v759 = vsub.s32 0, %v758
  %v760 = vrot.slane %v713, %v759
  %v761 = vlaneseq
  %v762 = vshrl.u32 %v761, 7
  %v763 = vsub.s32 0, %v762
  %v764 = vrot.slane %v715, %v763
  %v765 = vlaneseq
  %v766 = vshrl.u32 %v765, 7
  %v767 = vsub.s32 0, %v766
  %v768 = vrot.slane %v698, %v767
  %v769 = vlaneseq
  %v770 = vshrl.u32 %v769, 7
  %v771 = vsub.s32 0, %v770
  %v772 = vrot.slane %v712, %v771
  %v773 = vlaneseq
  %v774 = vshrl.u32 %v773, 7
  %v775 = vsub.s32 0, %v774
  %v776 = vrot.slane %v714, %v775
  %v777 = vlaneseq
  %v778 = vshrl.u32 %v777, 7
  %v779 = vsub.s32 0, %v778
  %v780 = vrot.slane %v716, %v779
  %v797 = vsub.f32 %v720, %v49
  %v798 = vsub.f32 %v720, %v50
  %v799 = vsub.f32 %v724, %v49
  %v800 = vsub.f32 %v724, %v50
  %v801 = vsub.f32 %v728, %v49
  %v802 = vsub.f32 %v728, %v50
  %v803 = vsub.f32 %v732, %v49
  %v804 = vsub.f32 %v732, %v50
  %v805 = vsub.f32 %v736, %v49
  %v806 = vsub.f32 %v736, %v50
  %v807 = vsub.f32 %v740, %v49
  %v808 = vsub.f32 %v740, %v50
  %v809 = vsub.f32 %v744, %v49
  %v810 = vsub.f32 %v744, %v50
  %v811 = vsub.f32 %v748, %v49
  %v812 = vsub.f32 %v748, %v50
  %v813 = vsub.f32 %v752, %v49
  %v814 = vsub.f32 %v752, %v50
  %v815 = vsub.f32 %v756, %v49
  %v816 = vsub.f32 %v756, %v50
  %v817 = vsub.f32 %v760, %v49
  %v818 = vsub.f32 %v760, %v50
  %v819 = vsub.f32 %v764, %v49
  %v820 = vsub.f32 %v764, %v50
  %v821 = vsub.f32 %v768, %v49
  %v822 = vsub.f32 %v768, %v50
  %v823 = vsub.f32 %v772, %v49
  %v824 = vsub.f32 %v772, %v50
  %v825 = vsub.f32 %v776, %v49
  %v826 = vsub.f32 %v776, %v50
  %v827 = vsub.f32 %v780, %v49
  %v828 = vsub.f32 %v780, %v50
  %v829 = vmul.f32 %v797, %v797
  %v830 = vmul.f32 %v798, %v798
  %v831 = vmul.f32 %v799, %v799
  %v832 = vmul.f32 %v800, %v800
  %v833 = vmul.f32 %v801, %v801
  %v834 = vmul.f32 %v802, %v802
  %v835 = vmul.f32 %v803, %v803
  %v836 = vmul.f32 %v804, %v804
  %v837 = vmul.f32 %v805, %v805
  %v838 = vmul.f32 %v806, %v806
  %v839 = vmul.f32 %v807, %v807
  %v840 = vmul.f32 %v808, %v808
  %v841 = vmul.f32 %v809, %v809
  %v842 = vmul.f32 %v810, %v810
  %v843 = vmul.f32 %v811, %v811
  %v844 = vmul.f32 %v812, %v812
  %v845 = vmul.f32 %v813, %v813
  %v846 = vmul.f32 %v814, %v814
  %v847 = vmul.f32 %v815, %v815
  %v848 = vmul.f32 %v816, %v816
  %v849 = vmul.f32 %v817, %v817
  %v850 = vmul.f32 %v818, %v818
  %v851 = vmul.f32 %v819, %v819
  %v852 = vmul.f32 %v820, %v820
  %v853 = vmul.f32 %v821, %v821
  %v854 = vmul.f32 %v822, %v822
  %v855 = vmul.f32 %v823, %v823
  %v856 = vmul.f32 %v824, %v824
  %v857 = vmul.f32 %v825, %v825
  %v858 = vmul.f32 %v826, %v826
  %v859 = vmul.f32 %v827, %v827
  %v860 = vmul.f32 %v828, %v828
  %v861 = vsub.f32 %v580, %v829
  %v862 = vsub.f32 %v581, %v830
  %v863 = vsub.f32 %v582, %v831
  %v864 = vsub.f32 %v583, %v832
  %v865 = vsub.f32 %v584, %v833
  %v866 = vsub.f32 %v585, %v834
  %v867 = vsub.f32 %v586, %v835
  %v868 = vsub.f32 %v587, %v836
  %v869 = vsub.f32 %v588, %v837
  %v870 = vsub.f32 %v589, %v838
  %v871 = vsub.f32 %v590, %v839
  %v872 = vsub.f32 %v591, %v840
  %v873 = vsub.f32 %v592, %v841
  %v874 = vsub.f32 %v593, %v842
  %v875 = vsub.f32 %v594, %v843
  %v876 = vsub.f32 %v595, %v844
  %v877 = vsub.f32 %v596, %v845
  %v878 = vsub.f32 %v597, %v846
  %v879 = vsub.f32 %v598, %v847
  %v880 = vsub.f32 %v599, %v848
  %v881 = vsub.f32 %v600, %v849
  %v882 = vsub.f32 %v601, %v850
  %v883 = vsub.f32 %v602, %v851
  %v884 = vsub.f32 %v603, %v852
  %v885 = vsub.f32 %v604, %v853
  %v886 = vsub.f32 %v605, %v854
  %v887 = vsub.f32 %v606, %v855
  %v888 = vsub.f32 %v607, %v856
  %v889 = vsub.f32 %v608, %v857
  %v890 = vsub.f32 %v609, %v858
  %v891 = vsub.f32 %v610, %v859
  %v892 = vsub.f32 %v611, %v860
  %v893 = vmul.f32 %v861, 1.442695
  %v894 = vpow.pop %v893
  %v895 = vmul.f32 %v862, 1.442695
  %v896 = vpow.pop %v895
  %v897 = vmul.f32 %v863, 1.442695
  %v898 = vpow.pop %v897
  %v899 = vmul.f32 %v864, 1.442695
  %v900 = vpow.pop %v899
  %v901 = vmul.f32 %v865, 1.442695
  %v902 = vpow.pop %v901
  %v903 = vmul.f32 %v866, 1.442695
  %v904 = vpow.pop %v903
  %v905 = vmul.f32 %v867, 1.442695
  %v906 = vpow.pop %v905
  %v907 = vmul.f32 %v868, 1.442695
  %v908 = vpow.pop %v907
  %v909 = vmul.f32 %v869, 1.442695
  %v910 = vpow.pop %v909
  %v911 = vmul.f32 %v870, 1.442695
  %v912 = vpow.pop %v911
  %v913 = vmul.f32 %v871, 1.442695
  %v914 = vpow.pop %v913
  %v915 = vmul.f32 %v872, 1.442695
  %v916 = vpow.pop %v915
  %v917 = vmul.f32 %v873, 1.442695
  %v918 = vpow.pop %v917
  %v919 = vmul.f32 %v874, 1.442695
  %v920 = vpow.pop %v919
  %v921 = vmul.f32 %v875, 1.442695
  %v922 = vpow.pop %v921
  %v923 = vmul.f32 %v876, 1.442695
  %v924 = vpow.pop %v923
  %v925 = vmul.f32 %v877, 1.442695
  %v926 = vpow.pop %v925
  %v927 = vmul.f32 %v878, 1.442695
  %v928 = vpow.pop %v927
  %v929 = vmul.f32 %v879, 1.442695
  %v930 = vpow.pop %v929
  %v931 = vmul.f32 %v880, 1.442695
  %v932 = vpow.pop %v931
  %v933 = vmul.f32 %v881, 1.442695
  %v934 = vpow.pop %v933
  %v935 = vmul.f32 %v882, 1.442695
  %v936 = vpow.pop %v935
  %v937 = vmul.f32 %v883, 1.442695
  %v938 = vpow.pop %v937
  %v939 = vmul.f32 %v884, 1.442695
  %v940 = vpow.pop %v939
  %v941 = vmul.f32 %v885, 1.442695
  %v942 = vpow.pop %v941
  %v943 = vmul.f32 %v886, 1.442695
  %v944 = vpow.pop %v943
  %v945 = vmul.f32 %v887, 1.442695
  %v946 = vpow.pop %v945
  %v947 = vmul.f32 %v888, 1.442695
  %v948 = vpow.pop %v947
  %v949 = vmul.f32 %v889, 1.442695
  %v950 = vpow.pop %v949
  %v951 = vmul.f32 %v890, 1.442695
  %v952 = vpow.pop %v951
  %v953 = vmul.f32 %v891, 1.442695
  %v954 = vpow.pop %v953
  %v955 = vmul.f32 %v892, 1.442695
  %v956 = vpow.pop %v955
  %vm957 = vcmask 64512
  %958 = vst.msk [vmem:[%s3] sm:$0xff] %vm957, %v894
  %959 = vst.msk [vmem:[%s3 + $0x8] sm:$0xff] %vm957, %v896
  %960 = vst.msk [vmem:[%s3 + $0x10] sm:$0xff] %vm957, %v898
  %961 = vst.msk [vmem:[%s3 + $0x18] sm:$0xff] %vm957, %v900
  %962 = vst.msk [vmem:[%s3 + $0x20] sm:$0xff] %vm957, %v902
  %963 = vst.msk [vmem:[%s3 + $0x28] sm:$0xff] %vm957, %v904
  %964 = vst.msk [vmem:[%s3 + $0x30] sm:$0xff] %vm957, %v906
  %965 = vst.msk [vmem:[%s3 + $0x38] sm:$0xff] %vm957, %v908
  %966 = vst.msk [vmem:[%s3 + $0x40] sm:$0xff] %vm957, %v910
  %967 = vst.msk [vmem:[%s3 + $0x48] sm:$0xff] %vm957, %v912
  %968 = vst.msk [vmem:[%s3 + $0x50] sm:$0xff] %vm957, %v914
  %969 = vst.msk [vmem:[%s3 + $0x58] sm:$0xff] %vm957, %v916
  %970 = vst.msk [vmem:[%s3 + $0x60] sm:$0xff] %vm957, %v918
  %971 = vst.msk [vmem:[%s3 + $0x68] sm:$0xff] %vm957, %v920
  %972 = vst.msk [vmem:[%s3 + $0x70] sm:$0xff] %vm957, %v922
  %973 = vst.msk [vmem:[%s3 + $0x78] sm:$0xff] %vm957, %v924
  %974 = vst.msk [vmem:[%s3 + $0x80] sm:$0xff] %vm957, %v926
  %975 = vst.msk [vmem:[%s3 + $0x88] sm:$0xff] %vm957, %v928
  %976 = vst.msk [vmem:[%s3 + $0x90] sm:$0xff] %vm957, %v930
  %977 = vst.msk [vmem:[%s3 + $0x98] sm:$0xff] %vm957, %v932
  %978 = vst.msk [vmem:[%s3 + $0xa0] sm:$0xff] %vm957, %v934
  %979 = vst.msk [vmem:[%s3 + $0xa8] sm:$0xff] %vm957, %v936
  %980 = vst.msk [vmem:[%s3 + $0xb0] sm:$0xff] %vm957, %v938
  %981 = vst.msk [vmem:[%s3 + $0xb8] sm:$0xff] %vm957, %v940
  %982 = vst.msk [vmem:[%s3 + $0xc0] sm:$0xff] %vm957, %v942
  %983 = vst.msk [vmem:[%s3 + $0xc8] sm:$0xff] %vm957, %v944
  %984 = vst.msk [vmem:[%s3 + $0xd0] sm:$0xff] %vm957, %v946
  %985 = vst.msk [vmem:[%s3 + $0xd8] sm:$0xff] %vm957, %v948
  %986 = vst.msk [vmem:[%s3 + $0xe0] sm:$0xff] %vm957, %v950
  %987 = vst.msk [vmem:[%s3 + $0xe8] sm:$0xff] %vm957, %v952
  %988 = vst.msk [vmem:[%s3 + $0xf0] sm:$0xff] %vm957, %v954
  %989 = vst.msk [vmem:[%s3 + $0xf8] sm:$0xff] %vm957, %v956
  // Predicated region
  $region14: #{tpu_custom_call.1} parent=0 // pred_check
    _
  $region15: #{tpu_custom_call.1} parent=0 // pred_check_branch
    %991 = sbr.rel (0) target = $region17
  $region16: #{tpu_custom_call.1} parent=0 // pred_region
    _
  $region17: #{tpu_custom_call.1} parent=0 // pred_fallthru
    _
  // Predicated region
  $region18: #{tpu_custom_call.1} parent=0 // pred_check
    _
  $region19: #{tpu_custom_call.1} parent=0 // pred_check_branch
    %993 = sbr.rel (0) target = $region21
  $region20: #{tpu_custom_call.1} parent=0 // pred_region
    _
  $region21: #{tpu_custom_call.1} parent=0 // pred_fallthru
    _

</llo_original>
